<compile_context>
chip_gen: v5e
topology: v5e:2x2
jax: 0.10.0
libtpu: 0.0.40
codegen_flags: <defaults>
</compile_context>

<pallas_src>
import functools

import jax
import jax.numpy as jnp
from jax.experimental import pallas as pl
from jax.experimental.pallas import tpu as pltpu


def _graph_conv_kernel(h_ref, adj_ref, wself_ref, bself_ref, wedge_ref,
                       bedge_ref, out_ref, *, num_edge_type, u_pad):
    ann = h_ref[0]                                             # (N, Cin)

    # Self / skip path:  ann @ W_self + b_self   -> (N, Upad)
    acc = (jnp.dot(ann, wself_ref[...], preferred_element_type=jnp.float32)
           + bself_ref[...])

    # All per-edge projections in ONE matmul: (N, Cin) x (Cin, E*Upad)
    m_all = (jnp.dot(ann, wedge_ref[...], preferred_element_type=jnp.float32)
             + bedge_ref[...])

    # sum_e adj[e] @ m_e  (statically unrolled; lane slices are vreg-aligned)
    for e in range(num_edge_type):
        acc = acc + jnp.dot(adj_ref[0, e],
                            m_all[:, e * u_pad:(e + 1) * u_pad],
                            preferred_element_type=jnp.float32)

    out_ref[0] = acc.astype(out_ref.dtype)                     # lane-dense store


@functools.partial(jax.jit, static_argnames="num_edge_type")
def graph_conv(adj, h, w_self, b_self, w_edge, b_edge, *, num_edge_type):
    """GraphConv forward.

    adj    : (B, E, N, N) float32
    h      : (B, N, Cin)  float32
    w_self : (Cin, Cout), b_self : (Cout,)
    w_edge : (Cin, Cout*E) -- column index = c*E + e (PyTorch layout)
    b_edge : (Cout*E,)
    returns (B, N, Cout) float32
    """
    B, N, Cin = h.shape
    E = num_edge_type
    Cout = w_self.shape[1]
    assert adj.shape == (B, E, N, N)
    assert w_edge.shape == (Cin, Cout * E)

    u_pad = ((Cout + 127) // 128) * 128

    # Per-edge weight slices follow the PyTorch reshape(B, N, Cout, E) layout:
    # column j = c*E + e  ->  W_e = w_edge[:, e::E].
    w_e = w_edge.reshape(Cin, Cout, E).transpose(2, 0, 1)      # (E, Cin, Cout)
    b_e = b_edge.reshape(Cout, E).transpose(1, 0)              # (E, Cout)

    # Zero-pad Cout -> u_pad and lay edge weights out as (Cin, E*u_pad) so the
    # kernel does one lane-wide matmul and vreg-aligned per-edge slices.
    w_self_p = jnp.zeros((Cin, u_pad), jnp.float32).at[:, :Cout].set(w_self)
    b_self_p = jnp.zeros((1, u_pad), jnp.float32).at[0, :Cout].set(b_self)
    w_edge_p = (jnp.zeros((E, Cin, u_pad), jnp.float32)
                .at[:, :, :Cout].set(w_e)
                .transpose(1, 0, 2).reshape(Cin, E * u_pad))
    b_edge_p = (jnp.zeros((E, u_pad), jnp.float32)
                .at[:, :Cout].set(b_e)
                .reshape(1, E * u_pad))

    flops = (2 * B * N * Cin * u_pad * (1 + E)      # self + edge projections
             + 2 * B * E * N * N * u_pad)           # adjacency contraction
    bytes_accessed = 4 * (h.size + adj.size + w_self_p.size + b_self_p.size
                          + w_edge_p.size + b_edge_p.size + B * N * u_pad)

    kernel = functools.partial(_graph_conv_kernel,
                               num_edge_type=E, u_pad=u_pad)

    out_padded = pl.pallas_call(
        kernel,
        out_shape=jax.ShapeDtypeStruct((B, N, u_pad), jnp.float32),
        grid_spec=pltpu.PrefetchScalarGridSpec(
            num_scalar_prefetch=0,
            grid=(B,),
            in_specs=[
                pl.BlockSpec((1, N, Cin), lambda b: (b, 0, 0)),       # h
                pl.BlockSpec((1, E, N, N), lambda b: (b, 0, 0, 0)),   # adj
                pl.BlockSpec((Cin, u_pad), lambda b: (0, 0)),         # W_self
                pl.BlockSpec((1, u_pad), lambda b: (0, 0)),           # b_self
                pl.BlockSpec((Cin, E * u_pad), lambda b: (0, 0)),     # W_edge
                pl.BlockSpec((1, E * u_pad), lambda b: (0, 0)),       # b_edge
            ],
            out_specs=pl.BlockSpec((1, N, u_pad), lambda b: (b, 0, 0)),
        ),
        compiler_params=pltpu.CompilerParams(
            dimension_semantics=("parallel",)),
        cost_estimate=pl.CostEstimate(
            flops=flops, transcendentals=0, bytes_accessed=bytes_accessed),
    )(h, adj, w_self_p, b_self_p, w_edge_p, b_edge_p)

    return out_padded[:, :, :Cout]


def reference_forward(adj, h, w_self, b_self, w_edge, b_edge, num_edge_type):
    """Pure-JAX reference matching the PyTorch GraphConv semantics."""
    B, N, _ = h.shape
    Cout = w_self.shape[1]
    hs = jnp.einsum("bnc,cu->bnu", h, w_self) + b_self          # (B, N, Cout)
    m = jnp.einsum("bnc,cu->bnu", h, w_edge) + b_edge           # (B, N, Cout*E)
    m = m.reshape(B, N, Cout, num_edge_type)
    m = jnp.transpose(m, (0, 3, 1, 2))                          # (B, E, N, Cout)
    hr = jnp.matmul(adj, m)                                     # (B, E, N, Cout)
    hr = hr.sum(axis=1)
    return hs + hr


if __name__ == "__main__":
    # Small shapes consistent with the module docstring (h: (B,9,8), adj: (B,4,9,9)).
    B, N = 2, 9
    CIN, COUT, E = 8, 64, 4

    key = jax.random.PRNGKey(0)
    k0, k1, k2, k3, k4, k5 = jax.random.split(key, 6)
    h = jax.random.normal(k0, (B, N, CIN), jnp.float32)
    adj = jax.random.uniform(k1, (B, E, N, N), jnp.float32)
    w_self = jax.random.normal(k2, (CIN, COUT), jnp.float32) * 0.1
    b_self = jax.random.normal(k3, (COUT,), jnp.float32) * 0.1
    w_edge = jax.random.normal(k4, (CIN, COUT * E), jnp.float32) * 0.1
    b_edge = jax.random.normal(k5, (COUT * E,), jnp.float32) * 0.1

    out = graph_conv(adj, h, w_self, b_self, w_edge, b_edge, num_edge_type=E)
    out = jax.block_until_ready(out)

    ref = reference_forward(adj, h, w_self, b_self, w_edge, b_edge, E)
    assert out.shape == (B, N, COUT)
    assert jnp.allclose(out, ref, atol=1e-4, rtol=1e-4), "mismatch vs reference"

    print("KERNEL_OK")
</pallas_src>

<mosaic_0001>
module attributes {stable_mosaic.version = 11 : i64} {
  func.func @_graph_conv_kernel(%arg0: i32, %arg1: memref<1x9x8xf32, #tpu.memory_space<vmem>>, %arg2: memref<1x4x9x9xf32, #tpu.memory_space<vmem>>, %arg3: memref<8x128xf32, #tpu.memory_space<vmem>>, %arg4: memref<1x128xf32, #tpu.memory_space<vmem>>, %arg5: memref<8x512xf32, #tpu.memory_space<vmem>>, %arg6: memref<1x512xf32, #tpu.memory_space<vmem>>, %arg7: memref<1x9x128xf32, #tpu.memory_space<vmem>>) attributes {dimension_semantics = [#tpu.dimension_semantics<parallel>], iteration_bounds = array<i64: 2>, scalar_prefetch = 0 : i64, scratch_operands = 0 : i64, tpu.core_type = #tpu.core_type<tc>, window_params = [{transform_indices = @transform_0, window_bounds = array<i64: 1, 9, 8>}, {transform_indices = @transform_1, window_bounds = array<i64: 1, 4, 9, 9>}, {pipeline_mode = #tpu.pipeline_mode<synchronous>, transform_indices = @transform_2, window_bounds = array<i64: 8, 128>}, {pipeline_mode = #tpu.pipeline_mode<synchronous>, transform_indices = @transform_3, window_bounds = array<i64: 1, 128>}, {pipeline_mode = #tpu.pipeline_mode<synchronous>, transform_indices = @transform_4, window_bounds = array<i64: 8, 512>}, {pipeline_mode = #tpu.pipeline_mode<synchronous>, transform_indices = @transform_5, window_bounds = array<i64: 1, 512>}, {transform_indices = @transform_6, window_bounds = array<i64: 1, 9, 128>}]} {
    %c0 = arith.constant 0 : index
    %c0_0 = arith.constant 0 : index
    %c0_1 = arith.constant 0 : index
    %0 = vector.load %arg1[%c0, %c0_0, %c0_1] : memref<1x9x8xf32, #tpu.memory_space<vmem>>, vector<1x9x8xf32>
    %1 = vector.shape_cast %0 : vector<1x9x8xf32> to vector<9x8xf32>
    %c0_2 = arith.constant 0 : index
    %c0_3 = arith.constant 0 : index
    %2 = vector.load %arg3[%c0_2, %c0_3] : memref<8x128xf32, #tpu.memory_space<vmem>>, vector<8x128xf32>
    %cst = arith.constant dense<0.000000e+00> : vector<9x128xf32>
    %3 = tpu.matmul %1, %2, %cst {dimension_numbers = #tpu.dot_dimension_numbers<[1], [0], [0], [1], [0, 0, 1, 1], [], []>} : vector<9x8xf32>, vector<8x128xf32>, vector<9x128xf32> -> vector<9x128xf32>
    %c0_4 = arith.constant 0 : index
    %c0_5 = arith.constant 0 : index
    %4 = vector.load %arg4[%c0_4, %c0_5] : memref<1x128xf32, #tpu.memory_space<vmem>>, vector<1x128xf32>
    %5 = vector.broadcast %4 : vector<1x128xf32> to vector<9x128xf32>
    %6 = arith.addf %3, %5 : vector<9x128xf32>
    %c0_6 = arith.constant 0 : index
    %c0_7 = arith.constant 0 : index
    %7 = vector.load %arg5[%c0_6, %c0_7] : memref<8x512xf32, #tpu.memory_space<vmem>>, vector<8x512xf32>
    %cst_8 = arith.constant dense<0.000000e+00> : vector<9x512xf32>
    %8 = tpu.matmul %1, %7, %cst_8 {dimension_numbers = #tpu.dot_dimension_numbers<[1], [0], [0], [1], [0, 0, 1, 1], [], []>} : vector<9x8xf32>, vector<8x512xf32>, vector<9x512xf32> -> vector<9x512xf32>
    %c0_9 = arith.constant 0 : index
    %c0_10 = arith.constant 0 : index
    %9 = vector.load %arg6[%c0_9, %c0_10] : memref<1x512xf32, #tpu.memory_space<vmem>>, vector<1x512xf32>
    %10 = vector.broadcast %9 : vector<1x512xf32> to vector<9x512xf32>
    %11 = arith.addf %8, %10 : vector<9x512xf32>
    %c0_11 = arith.constant 0 : index
    %c0_12 = arith.constant 0 : index
    %c0_13 = arith.constant 0 : index
    %c0_14 = arith.constant 0 : index
    %12 = vector.load %arg2[%c0_11, %c0_12, %c0_13, %c0_14] : memref<1x4x9x9xf32, #tpu.memory_space<vmem>>, vector<1x1x9x9xf32>
    %13 = vector.shape_cast %12 : vector<1x1x9x9xf32> to vector<9x9xf32>
    %14 = vector.extract_strided_slice %11 {offsets = [0, 0], sizes = [9, 128], strides = [1, 1]} : vector<9x512xf32> to vector<9x128xf32>
    %cst_15 = arith.constant dense<0.000000e+00> : vector<9x128xf32>
    %15 = tpu.matmul %13, %14, %cst_15 {dimension_numbers = #tpu.dot_dimension_numbers<[1], [0], [0], [1], [0, 0, 1, 1], [], []>} : vector<9x9xf32>, vector<9x128xf32>, vector<9x128xf32> -> vector<9x128xf32>
    %16 = arith.addf %6, %15 : vector<9x128xf32>
    %c0_16 = arith.constant 0 : index
    %c1 = arith.constant 1 : index
    %c0_17 = arith.constant 0 : index
    %c0_18 = arith.constant 0 : index
    %17 = vector.load %arg2[%c0_16, %c1, %c0_17, %c0_18] : memref<1x4x9x9xf32, #tpu.memory_space<vmem>>, vector<1x1x9x9xf32>
    %18 = vector.shape_cast %17 : vector<1x1x9x9xf32> to vector<9x9xf32>
    %19 = vector.extract_strided_slice %11 {offsets = [0, 128], sizes = [9, 128], strides = [1, 1]} : vector<9x512xf32> to vector<9x128xf32>
    %cst_19 = arith.constant dense<0.000000e+00> : vector<9x128xf32>
    %20 = tpu.matmul %18, %19, %cst_19 {dimension_numbers = #tpu.dot_dimension_numbers<[1], [0], [0], [1], [0, 0, 1, 1], [], []>} : vector<9x9xf32>, vector<9x128xf32>, vector<9x128xf32> -> vector<9x128xf32>
    %21 = arith.addf %16, %20 : vector<9x128xf32>
    %c0_20 = arith.constant 0 : index
    %c2 = arith.constant 2 : index
    %c0_21 = arith.constant 0 : index
    %c0_22 = arith.constant 0 : index
    %22 = vector.load %arg2[%c0_20, %c2, %c0_21, %c0_22] : memref<1x4x9x9xf32, #tpu.memory_space<vmem>>, vector<1x1x9x9xf32>
    %23 = vector.shape_cast %22 : vector<1x1x9x9xf32> to vector<9x9xf32>
    %24 = vector.extract_strided_slice %11 {offsets = [0, 256], sizes = [9, 128], strides = [1, 1]} : vector<9x512xf32> to vector<9x128xf32>
    %cst_23 = arith.constant dense<0.000000e+00> : vector<9x128xf32>
    %25 = tpu.matmul %23, %24, %cst_23 {dimension_numbers = #tpu.dot_dimension_numbers<[1], [0], [0], [1], [0, 0, 1, 1], [], []>} : vector<9x9xf32>, vector<9x128xf32>, vector<9x128xf32> -> vector<9x128xf32>
    %26 = arith.addf %21, %25 : vector<9x128xf32>
    %c0_24 = arith.constant 0 : index
    %c3 = arith.constant 3 : index
    %c0_25 = arith.constant 0 : index
    %c0_26 = arith.constant 0 : index
    %27 = vector.load %arg2[%c0_24, %c3, %c0_25, %c0_26] : memref<1x4x9x9xf32, #tpu.memory_space<vmem>>, vector<1x1x9x9xf32>
    %28 = vector.shape_cast %27 : vector<1x1x9x9xf32> to vector<9x9xf32>
    %29 = vector.extract_strided_slice %11 {offsets = [0, 384], sizes = [9, 128], strides = [1, 1]} : vector<9x512xf32> to vector<9x128xf32>
    %cst_27 = arith.constant dense<0.000000e+00> : vector<9x128xf32>
    %30 = tpu.matmul %28, %29, %cst_27 {dimension_numbers = #tpu.dot_dimension_numbers<[1], [0], [0], [1], [0, 0, 1, 1], [], []>} : vector<9x9xf32>, vector<9x128xf32>, vector<9x128xf32> -> vector<9x128xf32>
    %31 = arith.addf %26, %30 : vector<9x128xf32>
    %c0_28 = arith.constant 0 : index
    %c0_29 = arith.constant 0 : index
    %c0_30 = arith.constant 0 : index
    %32 = vector.load %arg7[%c0_28, %c0_29, %c0_30] : memref<1x9x128xf32, #tpu.memory_space<vmem>>, vector<1x9x128xf32>
    %33 = vector.shape_cast %32 : vector<1x9x128xf32> to vector<9x128xf32>
    %34 = vector.shape_cast %31 : vector<9x128xf32> to vector<1x9x128xf32>
    tpu.vector_store %arg7[%c0_28, %c0_29, %c0_30], %34 {strides = array<i32>} : memref<1x9x128xf32, #tpu.memory_space<vmem>>, vector<1x9x128xf32>,
    return
  }
  func.func @transform_0(%arg0: i32) -> (i32, i32, i32) {
    %c0_i32 = arith.constant 0 : i32
    %c0_i32_0 = arith.constant 0 : i32
    %c0_i32_1 = arith.constant 0 : i32
    return %arg0, %c0_i32, %c0_i32_0 : i32, i32, i32
  }
  func.func @transform_1(%arg0: i32) -> (i32, i32, i32, i32) {
    %c0_i32 = arith.constant 0 : i32
    %c0_i32_0 = arith.constant 0 : i32
    %c0_i32_1 = arith.constant 0 : i32
    %c0_i32_2 = arith.constant 0 : i32
    return %arg0, %c0_i32, %c0_i32_0, %c0_i32_1 : i32, i32, i32, i32
  }
  func.func @transform_2(%arg0: i32) -> (i32, i32) {
    %c0_i32 = arith.constant 0 : i32
    %c0_i32_0 = arith.constant 0 : i32
    %c0_i32_1 = arith.constant 0 : i32
    return %c0_i32, %c0_i32_0 : i32, i32
  }
  func.func @transform_3(%arg0: i32) -> (i32, i32) {
    %c0_i32 = arith.constant 0 : i32
    %c0_i32_0 = arith.constant 0 : i32
    %c0_i32_1 = arith.constant 0 : i32
    return %c0_i32, %c0_i32_0 : i32, i32
  }
  func.func @transform_4(%arg0: i32) -> (i32, i32) {
    %c0_i32 = arith.constant 0 : i32
    %c0_i32_0 = arith.constant 0 : i32
    %c0_i32_1 = arith.constant 0 : i32
    return %c0_i32, %c0_i32_0 : i32, i32
  }
  func.func @transform_5(%arg0: i32) -> (i32, i32) {
    %c0_i32 = arith.constant 0 : i32
    %c0_i32_0 = arith.constant 0 : i32
    %c0_i32_1 = arith.constant 0 : i32
    return %c0_i32, %c0_i32_0 : i32, i32
  }
  func.func @transform_6(%arg0: i32) -> (i32, i32, i32) {
    %c0_i32 = arith.constant 0 : i32
    %c0_i32_0 = arith.constant 0 : i32
    %c0_i32_1 = arith.constant 0 : i32
    return %arg0, %c0_i32, %c0_i32_0 : i32, i32, i32
  }
}

</mosaic_0001>

<llo_original>
// kernel: graph_conv.1
$region0: #{graph_conv.1}
  #allocation0 [shape = 'u32[]', space=smem, size = 0x4, offset = 0x4, fixed_abs, tag = 'smem constant byte address 0x4 - core index']
  #allocation1 [shape = 'u32[72,128]{1,0:T(1,128)}', space=vmem, size = 0x9000, scoped, tag = 'internal scratch']
  %s0 = inlined_call_operand.vmem [shape: f32[2,9,8], index: 0, kind: input, shape index: {}]
  %s1 = inlined_call_operand.vmem [shape: f32[2,4,9,9], index: 1, kind: input, shape index: {}]
  %s2 = inlined_call_operand.vmem [shape: f32[8,128], index: 2, kind: input, shape index: {}]
  %s3 = inlined_call_operand.vmem [shape: f32[1,128], index: 3, kind: input, shape index: {}]
  %s4 = inlined_call_operand.vmem [shape: f32[8,512], index: 4, kind: input, shape index: {}]
  %s5 = inlined_call_operand.vmem [shape: f32[1,512], index: 5, kind: input, shape index: {}]
  %s6 = inlined_call_operand.vmem [shape: f32[2,9,128], index: 6, kind: output, shape index: {}]
  %s7 = sld [smem:[#allocation0]]
  $region57: #{graph_conv.1} parent=0
    _
  %s9 = ssub.s32 1, %s7
  %s10 = scalar_select 0, %s9, %s7
  loop: start=0, step=1, limit=4
  $region2: #{graph_conv.1} parent=0 // loop_pre_header
    _
  $region3: #{graph_conv.1} parent=0 // loop_header
    %s12 = sphi 0, %s16
    %p13 = scmp.ge.s32.totalorder %s12, 4
    %s22 = sphi 0, %s24
    %s25 = sphi 0, %s22
    %s26 = sphi 0, %s25
    %s42 = sphi 0, %s26
    %s48 = sphi 0, %s50
    %s51 = sphi 0, %s48
    %s52 = sphi 0, %s51
    %s68 = sphi 0, %s52
    %s72 = sphi 0, %s72
    %s74 = sphi 0, %s72
    %s75 = sphi 0, %s74
    %s89 = sphi 0, %s75
    %s93 = sphi 0, %s93
    %s95 = sphi 0, %s93
    %s96 = sphi 0, %s95
    %s110 = sphi 0, %s96
    %s114 = sphi 0, %s114
    %s116 = sphi 0, %s114
    %s117 = sphi 0, %s116
    %s131 = sphi 0, %s117
    %s135 = sphi 0, %s135
    %s137 = sphi 0, %s135
    %s138 = sphi 0, %s137
    %s152 = sphi 0, %s138
    %s158 = sphi 0, %s160
    %s161 = sphi 0, %s158
    %s162 = sphi 0, %s161
    %s178 = sphi 0, %s162
  $region4: #{graph_conv.1} parent=0 // loop_header_branch
    %15 = sbr.rel (%p13) target = $region8
  $region5: #{graph_conv.1} parent=0 // loop_body
    %s17 = ssub.s32 %s12, 1
    %s18 = ssub.s32 %s12, 2
    %s19 = sadd.s32 %s12, 1
    %s20 = ssub.s32 %s12, %s19
    %p21 = scmp.eq.s32.totalorder %s20, 0
    %s23 = sadd.s32 %s22, 1
    %s24 = scalar_select %p21, %s22, %s23
    %p27 = pneg %p21
    %p28 = scmp.eq.s32.totalorder %s12, 1
    %p29 = por %p27, %p28
    %p30 = scmp.ne.s32.totalorder %s22, %s25
    %p31 = scmp.eq.s32.totalorder %s12, 0
    %p32 = por %p30, %p31
    %p33 = scmp.ne.s32.totalorder %s22, %s25
    %p34 = scmp.eq.s32.totalorder %s17, 1
    %p35 = por %p33, %p34
    %p36 = scmp.ne.s32.totalorder %s25, %s26
    %p37 = scmp.eq.s32.totalorder %s17, 0
    %p38 = por %p36, %p37
    %p39 = scmp.ne.s32.totalorder %s25, %s26
    %p40 = scmp.eq.s32.totalorder %s18, 1
    %p41 = por %p39, %p40
    %p43 = scmp.ne.s32.totalorder %s26, %s42
    %p44 = scmp.eq.s32.totalorder %s18, 0
    %p45 = por %p43, %p44
    %s46 = ssub.s32 %s12, %s19
    %p47 = scmp.eq.s32.totalorder %s46, 0
    %s49 = sadd.s32 %s48, 1
    %s50 = scalar_select %p47, %s48, %s49
    %p53 = pneg %p47
    %p54 = scmp.eq.s32.totalorder %s12, 1
    %p55 = por %p53, %p54
    %p56 = scmp.ne.s32.totalorder %s48, %s51
    %p57 = scmp.eq.s32.totalorder %s12, 0
    %p58 = por %p56, %p57
    %p59 = scmp.ne.s32.totalorder %s48, %s51
    %p60 = scmp.eq.s32.totalorder %s17, 1
    %p61 = por %p59, %p60
    %p62 = scmp.ne.s32.totalorder %s51, %s52
    %p63 = scmp.eq.s32.totalorder %s17, 0
    %p64 = por %p62, %p63
    %p65 = scmp.ne.s32.totalorder %s51, %s52
    %p66 = scmp.eq.s32.totalorder %s18, 1
    %p67 = por %p65, %p66
    %p69 = scmp.ne.s32.totalorder %s52, %s68
    %p70 = scmp.eq.s32.totalorder %s18, 0
    %p71 = por %p69, %p70
    %s73 = sadd.s32 %s72, 1
    %p76 = scmp.eq.s32.totalorder %s12, 1
    %p77 = scmp.ne.s32.totalorder %s72, %s74
    %p78 = scmp.eq.s32.totalorder %s12, 0
    %p79 = por %p77, %p78
    %p80 = scmp.ne.s32.totalorder %s72, %s74
    %p81 = scmp.eq.s32.totalorder %s17, 1
    %p82 = por %p80, %p81
    %p83 = scmp.ne.s32.totalorder %s74, %s75
    %p84 = scmp.eq.s32.totalorder %s17, 0
    %p85 = por %p83, %p84
    %p86 = scmp.ne.s32.totalorder %s74, %s75
    %p87 = scmp.eq.s32.totalorder %s18, 1
    %p88 = por %p86, %p87
    %p90 = scmp.ne.s32.totalorder %s75, %s89
    %p91 = scmp.eq.s32.totalorder %s18, 0
    %p92 = por %p90, %p91
    %s94 = sadd.s32 %s93, 1
    %p97 = scmp.eq.s32.totalorder %s12, 1
    %p98 = scmp.ne.s32.totalorder %s93, %s95
    %p99 = scmp.eq.s32.totalorder %s12, 0
    %p100 = por %p98, %p99
    %p101 = scmp.ne.s32.totalorder %s93, %s95
    %p102 = scmp.eq.s32.totalorder %s17, 1
    %p103 = por %p101, %p102
    %p104 = scmp.ne.s32.totalorder %s95, %s96
    %p105 = scmp.eq.s32.totalorder %s17, 0
    %p106 = por %p104, %p105
    %p107 = scmp.ne.s32.totalorder %s95, %s96
    %p108 = scmp.eq.s32.totalorder %s18, 1
    %p109 = por %p107, %p108
    %p111 = scmp.ne.s32.totalorder %s96, %s110
    %p112 = scmp.eq.s32.totalorder %s18, 0
    %p113 = por %p111, %p112
    %s115 = sadd.s32 %s114, 1
    %p118 = scmp.eq.s32.totalorder %s12, 1
    %p119 = scmp.ne.s32.totalorder %s114, %s116
    %p120 = scmp.eq.s32.totalorder %s12, 0
    %p121 = por %p119, %p120
    %p122 = scmp.ne.s32.totalorder %s114, %s116
    %p123 = scmp.eq.s32.totalorder %s17, 1
    %p124 = por %p122, %p123
    %p125 = scmp.ne.s32.totalorder %s116, %s117
    %p126 = scmp.eq.s32.totalorder %s17, 0
    %p127 = por %p125, %p126
    %p128 = scmp.ne.s32.totalorder %s116, %s117
    %p129 = scmp.eq.s32.totalorder %s18, 1
    %p130 = por %p128, %p129
    %p132 = scmp.ne.s32.totalorder %s117, %s131
    %p133 = scmp.eq.s32.totalorder %s18, 0
    %p134 = por %p132, %p133
    %s136 = sadd.s32 %s135, 1
    %p139 = scmp.eq.s32.totalorder %s12, 1
    %p140 = scmp.ne.s32.totalorder %s135, %s137
    %p141 = scmp.eq.s32.totalorder %s12, 0
    %p142 = por %p140, %p141
    %p143 = scmp.ne.s32.totalorder %s135, %s137
    %p144 = scmp.eq.s32.totalorder %s17, 1
    %p145 = por %p143, %p144
    %p146 = scmp.ne.s32.totalorder %s137, %s138
    %p147 = scmp.eq.s32.totalorder %s17, 0
    %p148 = por %p146, %p147
    %p149 = scmp.ne.s32.totalorder %s137, %s138
    %p150 = scmp.eq.s32.totalorder %s18, 1
    %p151 = por %p149, %p150
    %p153 = scmp.ne.s32.totalorder %s138, %s152
    %p154 = scmp.eq.s32.totalorder %s18, 0
    %p155 = por %p153, %p154
    %s156 = ssub.s32 %s12, %s19
    %p157 = scmp.eq.s32.totalorder %s156, 0
    %s159 = sadd.s32 %s158, 1
    %s160 = scalar_select %p157, %s158, %s159
    %p163 = pneg %p157
    %p164 = scmp.eq.s32.totalorder %s12, 1
    %p165 = por %p163, %p164
    %p166 = scmp.ne.s32.totalorder %s158, %s161
    %p167 = scmp.eq.s32.totalorder %s12, 0
    %p168 = por %p166, %p167
    %p169 = scmp.ne.s32.totalorder %s158, %s161
    %p170 = scmp.eq.s32.totalorder %s17, 1
    %p171 = por %p169, %p170
    %p172 = scmp.ne.s32.totalorder %s161, %s162
    %p173 = scmp.eq.s32.totalorder %s17, 0
    %p174 = por %p172, %p173
    %p175 = scmp.ne.s32.totalorder %s161, %s162
    %p176 = scmp.eq.s32.totalorder %s18, 1
    %p177 = por %p175, %p176
    %p179 = scmp.ne.s32.totalorder %s162, %s178
    %p180 = scmp.eq.s32.totalorder %s18, 0
    %p181 = por %p179, %p180
    %p182 = scmp.le.s32.totalorder 1, %s12
    %p183 = scmp.lt.s32.totalorder %s12, 3
    %p184 = pnand %p182, %p183
    %p185 = pneg %p184
    // Predicated region
    $region9: #{graph_conv.1} parent=5 // pred_check
      _
    $region10: #{graph_conv.1} parent=5 // pred_check_branch
      %187 = sbr.rel (%p184) target = $region12
    $region11: #{graph_conv.1} parent=5 // pred_region
      %s188 = ssub.s32 %s12, 1
      // Predicated region
      $region13: #{graph_conv.1} parent=11 // pred_check
        %p189 = pneg %p85
      $region14: #{graph_conv.1} parent=11 // pred_check_branch
        %191 = sbr.rel (%p189) target = $region16
      $region15: #{graph_conv.1} parent=11 // pred_region
        _
      $region16: #{graph_conv.1} parent=11 // pred_fallthru
        _
      // Predicated region
      $region17: #{graph_conv.1} parent=11 // pred_check
        %p192 = pneg %p106
      $region18: #{graph_conv.1} parent=11 // pred_check_branch
        %194 = sbr.rel (%p192) target = $region20
      $region19: #{graph_conv.1} parent=11 // pred_region
        _
      $region20: #{graph_conv.1} parent=11 // pred_fallthru
        _
      // Predicated region
      $region21: #{graph_conv.1} parent=11 // pred_check
        %p195 = pneg %p127
      $region22: #{graph_conv.1} parent=11 // pred_check_branch
        %197 = sbr.rel (%p195) target = $region24
      $region23: #{graph_conv.1} parent=11 // pred_region
        _
      $region24: #{graph_conv.1} parent=11 // pred_fallthru
        _
      // Predicated region
      $region25: #{graph_conv.1} parent=11 // pred_check
        %p198 = pneg %p148
      $region26: #{graph_conv.1} parent=11 // pred_check_branch
        %200 = sbr.rel (%p198) target = $region28
      $region27: #{graph_conv.1} parent=11 // pred_region
        _
      $region28: #{graph_conv.1} parent=11 // pred_fallthru
        _
    $region12: #{graph_conv.1} parent=5 // pred_fallthru
      _
    %p201 = scmp.lt.s32.totalorder %s12, 2
    // Predicated region
    $region29: #{graph_conv.1} parent=5 // pred_check
      %p202 = pneg %p201
    $region30: #{graph_conv.1} parent=5 // pred_check_branch
      %204 = sbr.rel (%p202) target = $region32
    $region31: #{graph_conv.1} parent=5 // pred_region
      // Predicated region
      $region33: #{graph_conv.1} parent=31 // pred_check
        %p205 = pneg %p32
      $region34: #{graph_conv.1} parent=31 // pred_check_branch
        %207 = sbr.rel (%p205) target = $region36
      $region35: #{graph_conv.1} parent=31 // pred_region
        %p208 = scmp.lt.s32.totalorder %s12, 1
        %s209 = scalar_select %p208, %s12, 1
        %s210 = smul.addr %s209, 2
        %s211 = smul.addr %s210, 8
        %s212 = scalar_lea.vmem %s0, %s211
      $region36: #{graph_conv.1} parent=31 // pred_fallthru
        _
      // Predicated region
      $region37: #{graph_conv.1} parent=31 // pred_check
        %p213 = pneg %p58
      $region38: #{graph_conv.1} parent=31 // pred_check_branch
        %215 = sbr.rel (%p213) target = $region40
      $region39: #{graph_conv.1} parent=31 // pred_region
        %p216 = scmp.lt.s32.totalorder %s12, 1
        %s217 = scalar_select %p216, %s12, 1
        %s218 = smul.addr %s217, 8
        %s219 = smul.addr %s218, 8
        %s220 = scalar_lea.vmem %s1, %s219
      $region40: #{graph_conv.1} parent=31 // pred_fallthru
        _
    $region32: #{graph_conv.1} parent=5 // pred_fallthru
      _
    %p221 = scmp.le.s32.totalorder 1, %s12
    %p222 = scmp.lt.s32.totalorder %s12, 3
    %p223 = pnand %p221, %p222
    %p224 = pneg %p223
    // Predicated region
    $region41: #{graph_conv.1} parent=5 // pred_check
      _
    $region42: #{graph_conv.1} parent=5 // pred_check_branch
      %226 = sbr.rel (%p223) target = $region44
    $region43: #{graph_conv.1} parent=5 // pred_region
      %s227 = ssub.s32 %s12, 1
      %p228 = scmp.lt.s32.totalorder %s17, 1
      %s229 = scalar_select %p228, %s17, 1
      %s230 = smul.addr %s229, 2
      %s231 = smul.addr %s230, 8
      %s232 = scalar_lea.vmem %s0, %s231
      %p233 = pneg %p38
      %p234 = pneg %p35
      %p235 = scmp.lt.s32.totalorder %s17, 1
      %s236 = scalar_select %p235, %s17, 1
      %s237 = smul.addr %s236, 8
      %s238 = smul.addr %s237, 8
      %s239 = scalar_lea.vmem %s1, %s238
      %p240 = pneg %p64
      %p241 = pneg %p61
      %p242 = pneg %p85
      %p243 = pneg %p82
      %p244 = pneg %p106
      %p245 = pneg %p103
      %p246 = pneg %p127
      %p247 = pneg %p124
      %p248 = pneg %p148
      %p249 = pneg %p145
      %p250 = pneg %p174
      %p251 = pneg %p171
      %p252 = scmp.lt.s32.totalorder %s17, 1
      %s253 = scalar_select %p252, %s17, 1
      %s254 = smul.addr %s253, 2
      %s255 = smul.addr %s254, 8
      %s256 = scalar_lea.vmem %s6, %s255
      %p257 = scmp.lt.s32.totalorder %s17, 1
      %s258 = scalar_select %p257, %s17, 1
      %s259 = smul.addr %s258, 2
      %s260 = smul.addr %s259, 8
      %s261 = scalar_lea.vmem %s0, %s260
      %p262 = scmp.lt.s32.totalorder %s17, 1
      %s263 = scalar_select %p262, %s17, 1
      %s264 = smul.addr %s263, 8
      %s265 = smul.addr %s264, 8
      %s266 = scalar_lea.vmem %s1, %s265
      %p267 = scmp.lt.s32.totalorder %s17, 1
      %s268 = scalar_select %p267, %s17, 1
      %s269 = smul.addr %s268, 2
      %s270 = smul.addr %s269, 8
      %s271 = scalar_lea.vmem %s6, %s270
      %v272 = vld [vmem:[%s261] sm:$0xff]
      %v273 = vld [vmem:[%s261 + $0x8] sm:$0x1]
      %v274 = vld [vmem:[%s2] sm:$0xff]
      %v275 = vld [vmem:[%s3] sm:$0x1]
      %v277 = vperm.slane %v275, 0
      %vm279 = vcmask 64512
      %v281 = vsel %vm279, %v272, 0
      %v284 = vsel %vm279, %v273, 0
      %286 = vmatpush.msra.mxu0 0.0
      %287 = vmatpush.msra.mxu0 0.0
      %288 = vmatpush.msra.mxu0 0.0
      %289 = vmatpush.msra.mxu0 0.0
      %290 = vmatpush.msra.mxu0 0.0
      %291 = vmatpush.msra.mxu0 0.0
      %292 = vmatpush.msra.mxu0 0.0
      %293 = vmatpush.msra.mxu0 0.0
      %294 = vmatpush.msra.mxu0 0.0
      %295 = vmatpush.msra.mxu0 0.0
      %296 = vmatpush.msra.mxu0 0.0
      %297 = vmatpush.msra.mxu0 0.0
      %298 = vmatpush.msra.mxu0 0.0
      %299 = vmatpush.msra.mxu0 0.0
      %300 = vmatpush.msra.mxu0 0.0
      %301 = vmatpush.msra.mxu0 %v274
      %302 = vmatmul.f32.gmra.mxu0 %v281
      %v303 = vpop.f32.mrf.mxu0
      %v304 = vadd.f32 %v277, %v303
      %305 = vmatmul.f32.gmra.mxu0 %v284
      %v306 = vpop.f32.mrf.mxu0
      %v307 = vadd.f32 %v277, %v306
      %308 = vdwg.mxu0
      %v309 = vld [vmem:[%s4] sm:$0xff]
      %v310 = vld [vmem:[%s4 + $0x8] sm:$0xff]
      %v311 = vld [vmem:[%s4 + $0x10] sm:$0xff]
      %v312 = vld [vmem:[%s4 + $0x18] sm:$0xff]
      %v313 = vld [vmem:[%s5] sm:$0xf]
      %v315 = vperm.slane %v313, 0
      %v316 = vperm.slane %v313, 1
      %v317 = vperm.slane %v313, 2
      %v318 = vperm.slane %v313, 3
      %323 = vmatpush.msra.mxu0 0.0
      %324 = vmatpush.msra.mxu0 0.0
      %325 = vmatpush.msra.mxu0 0.0
      %326 = vmatpush.msra.mxu0 0.0
      %327 = vmatpush.msra.mxu0 0.0
      %328 = vmatpush.msra.mxu0 0.0
      %329 = vmatpush.msra.mxu0 0.0
      %330 = vmatpush.msra.mxu0 0.0
      %331 = vmatpush.msra.mxu0 0.0
      %332 = vmatpush.msra.mxu0 0.0
      %333 = vmatpush.msra.mxu0 0.0
      %334 = vmatpush.msra.mxu0 0.0
      %335 = vmatpush.msra.mxu0 0.0
      %336 = vmatpush.msra.mxu0 0.0
      %337 = vmatpush.msra.mxu0 0.0
      %338 = vmatpush.msra.mxu0 %v309
      %339 = vmatmul.f32.gmra.mxu0 %v281
      %v340 = vpop.f32.mrf.mxu0
      %v341 = vadd.f32 %v315, %v340
      %342 = vmatmul.f32.gmra.mxu0 %v284
      %v343 = vpop.f32.mrf.mxu0
      %v344 = vadd.f32 %v315, %v343
      %345 = vdwg.mxu0
      %346 = vmatpush.msra.mxu0 0.0
      %347 = vmatpush.msra.mxu0 0.0
      %348 = vmatpush.msra.mxu0 0.0
      %349 = vmatpush.msra.mxu0 0.0
      %350 = vmatpush.msra.mxu0 0.0
      %351 = vmatpush.msra.mxu0 0.0
      %352 = vmatpush.msra.mxu0 0.0
      %353 = vmatpush.msra.mxu0 0.0
      %354 = vmatpush.msra.mxu0 0.0
      %355 = vmatpush.msra.mxu0 0.0
      %356 = vmatpush.msra.mxu0 0.0
      %357 = vmatpush.msra.mxu0 0.0
      %358 = vmatpush.msra.mxu0 0.0
      %359 = vmatpush.msra.mxu0 0.0
      %360 = vmatpush.msra.mxu0 0.0
      %361 = vmatpush.msra.mxu0 %v310
      %362 = vmatmul.f32.gmra.mxu0 %v281
      %v363 = vpop.f32.mrf.mxu0
      %v364 = vadd.f32 %v316, %v363
      %365 = vmatmul.f32.gmra.mxu0 %v284
      %v366 = vpop.f32.mrf.mxu0
      %v367 = vadd.f32 %v316, %v366
      %368 = vdwg.mxu0
      %369 = vmatpush.msra.mxu0 0.0
      %370 = vmatpush.msra.mxu0 0.0
      %371 = vmatpush.msra.mxu0 0.0
      %372 = vmatpush.msra.mxu0 0.0
      %373 = vmatpush.msra.mxu0 0.0
      %374 = vmatpush.msra.mxu0 0.0
      %375 = vmatpush.msra.mxu0 0.0
      %376 = vmatpush.msra.mxu0 0.0
      %377 = vmatpush.msra.mxu0 0.0
      %378 = vmatpush.msra.mxu0 0.0
      %379 = vmatpush.msra.mxu0 0.0
      %380 = vmatpush.msra.mxu0 0.0
      %381 = vmatpush.msra.mxu0 0.0
      %382 = vmatpush.msra.mxu0 0.0
      %383 = vmatpush.msra.mxu0 0.0
      %384 = vmatpush.msra.mxu0 %v311
      %385 = vmatmul.f32.gmra.mxu0 %v281
      %v386 = vpop.f32.mrf.mxu0
      %v387 = vadd.f32 %v317, %v386
      %388 = vmatmul.f32.gmra.mxu0 %v284
      %v389 = vpop.f32.mrf.mxu0
      %v390 = vadd.f32 %v317, %v389
      %391 = vdwg.mxu0
      %392 = vmatpush.msra.mxu0 0.0
      %393 = vmatpush.msra.mxu0 0.0
      %394 = vmatpush.msra.mxu0 0.0
      %395 = vmatpush.msra.mxu0 0.0
      %396 = vmatpush.msra.mxu0 0.0
      %397 = vmatpush.msra.mxu0 0.0
      %398 = vmatpush.msra.mxu0 0.0
      %399 = vmatpush.msra.mxu0 0.0
      %400 = vmatpush.msra.mxu0 0.0
      %401 = vmatpush.msra.mxu0 0.0
      %402 = vmatpush.msra.mxu0 0.0
      %403 = vmatpush.msra.mxu0 0.0
      %404 = vmatpush.msra.mxu0 0.0
      %405 = vmatpush.msra.mxu0 0.0
      %406 = vmatpush.msra.mxu0 0.0
      %407 = vmatpush.msra.mxu0 %v312
      %408 = vmatmul.f32.gmra.mxu0 %v281
      %v409 = vpop.f32.mrf.mxu0
      %v410 = vadd.f32 %v318, %v409
      %411 = vmatmul.f32.gmra.mxu0 %v284
      %v412 = vpop.f32.mrf.mxu0
      %v413 = vadd.f32 %v318, %v412
      %414 = vdwg.mxu0
      %v415 = vld [vmem:[%s266] sm:$0xff]
      %v416 = vld [vmem:[%s266 + $0x8] sm:$0x1]
      %vm417 = vcmask 72704
      %v419 = vsel %vm417, %v415, 0
      %v422 = vsel %vm417, %v416, 0
      %vm424 = vcmask 1040384
      %v426 = vsel %vm424, %v344, 0
      %428 = vmatpush.msra.mxu0 0.0
      %429 = vmatpush.msra.mxu0 0.0
      %430 = vmatpush.msra.mxu0 0.0
      %431 = vmatpush.msra.mxu0 0.0
      %432 = vmatpush.msra.mxu0 0.0
      %433 = vmatpush.msra.mxu0 0.0
      %434 = vmatpush.msra.mxu0 0.0
      %435 = vmatpush.msra.mxu0 0.0
      %436 = vmatpush.msra.mxu0 0.0
      %437 = vmatpush.msra.mxu0 0.0
      %438 = vmatpush.msra.mxu0 0.0
      %439 = vmatpush.msra.mxu0 0.0
      %440 = vmatpush.msra.mxu0 0.0
      %441 = vmatpush.msra.mxu0 0.0
      %442 = vmatpush.msra.mxu0 %v426
      %443 = vmatpush.msra.mxu0 %v341
      %444 = vmatmul.f32.gmra.mxu0 %v419
      %v445 = vpop.f32.mrf.mxu0
      %v446 = vadd.f32 0.0, %v445
      %447 = vmatmul.f32.gmra.mxu0 %v422
      %v448 = vpop.f32.mrf.mxu0
      %v449 = vadd.f32 0.0, %v448
      %450 = vdwg.mxu0
      %v451 = vadd.f32 %v304, %v446
      %v452 = vadd.f32 %v307, %v449
      %s453 = scalar_lea.vmem %s266, 16
      %v454 = vld [vmem:[%s453] sm:$0xff]
      %v455 = vld [vmem:[%s453 + $0x8] sm:$0x1]
      %v457 = vsel %vm417, %v454, 0
      %v460 = vsel %vm417, %v455, 0
      %v463 = vsel %vm424, %v367, 0
      %465 = vmatpush.msra.mxu0 0.0
      %466 = vmatpush.msra.mxu0 0.0
      %467 = vmatpush.msra.mxu0 0.0
      %468 = vmatpush.msra.mxu0 0.0
      %469 = vmatpush.msra.mxu0 0.0
      %470 = vmatpush.msra.mxu0 0.0
      %471 = vmatpush.msra.mxu0 0.0
      %472 = vmatpush.msra.mxu0 0.0
      %473 = vmatpush.msra.mxu0 0.0
      %474 = vmatpush.msra.mxu0 0.0
      %475 = vmatpush.msra.mxu0 0.0
      %476 = vmatpush.msra.mxu0 0.0
      %477 = vmatpush.msra.mxu0 0.0
      %478 = vmatpush.msra.mxu0 0.0
      %479 = vmatpush.msra.mxu0 %v463
      %480 = vmatpush.msra.mxu0 %v364
      %481 = vmatmul.f32.gmra.mxu0 %v457
      %v482 = vpop.f32.mrf.mxu0
      %v483 = vadd.f32 0.0, %v482
      %484 = vmatmul.f32.gmra.mxu0 %v460
      %v485 = vpop.f32.mrf.mxu0
      %v486 = vadd.f32 0.0, %v485
      %487 = vdwg.mxu0
      %v488 = vadd.f32 %v451, %v483
      %v489 = vadd.f32 %v452, %v486
      %s490 = scalar_lea.vmem %s266, 32
      %v491 = vld [vmem:[%s490] sm:$0xff]
      %v492 = vld [vmem:[%s490 + $0x8] sm:$0x1]
      %v494 = vsel %vm417, %v491, 0
      %v497 = vsel %vm417, %v492, 0
      %v500 = vsel %vm424, %v390, 0
      %502 = vmatpush.msra.mxu0 0.0
      %503 = vmatpush.msra.mxu0 0.0
      %504 = vmatpush.msra.mxu0 0.0
      %505 = vmatpush.msra.mxu0 0.0
      %506 = vmatpush.msra.mxu0 0.0
      %507 = vmatpush.msra.mxu0 0.0
      %508 = vmatpush.msra.mxu0 0.0
      %509 = vmatpush.msra.mxu0 0.0
      %510 = vmatpush.msra.mxu0 0.0
      %511 = vmatpush.msra.mxu0 0.0
      %512 = vmatpush.msra.mxu0 0.0
      %513 = vmatpush.msra.mxu0 0.0
      %514 = vmatpush.msra.mxu0 0.0
      %515 = vmatpush.msra.mxu0 0.0
      %516 = vmatpush.msra.mxu0 %v500
      %517 = vmatpush.msra.mxu0 %v387
      %518 = vmatmul.f32.gmra.mxu0 %v494
      %v519 = vpop.f32.mrf.mxu0
      %v520 = vadd.f32 0.0, %v519
      %521 = vmatmul.f32.gmra.mxu0 %v497
      %v522 = vpop.f32.mrf.mxu0
      %v523 = vadd.f32 0.0, %v522
      %524 = vdwg.mxu0
      %v525 = vadd.f32 %v488, %v520
      %v526 = vadd.f32 %v489, %v523
      %s527 = scalar_lea.vmem %s266, 48
      %v528 = vld [vmem:[%s527] sm:$0xff]
      %v529 = vld [vmem:[%s527 + $0x8] sm:$0x1]
      %v531 = vsel %vm417, %v528, 0
      %v534 = vsel %vm417, %v529, 0
      %v537 = vsel %vm424, %v413, 0
      %539 = vmatpush.msra.mxu0 0.0
      %540 = vmatpush.msra.mxu0 0.0
      %541 = vmatpush.msra.mxu0 0.0
      %542 = vmatpush.msra.mxu0 0.0
      %543 = vmatpush.msra.mxu0 0.0
      %544 = vmatpush.msra.mxu0 0.0
      %545 = vmatpush.msra.mxu0 0.0
      %546 = vmatpush.msra.mxu0 0.0
      %547 = vmatpush.msra.mxu0 0.0
      %548 = vmatpush.msra.mxu0 0.0
      %549 = vmatpush.msra.mxu0 0.0
      %550 = vmatpush.msra.mxu0 0.0
      %551 = vmatpush.msra.mxu0 0.0
      %552 = vmatpush.msra.mxu0 0.0
      %553 = vmatpush.msra.mxu0 %v537
      %554 = vmatpush.msra.mxu0 %v410
      %555 = vmatmul.f32.gmra.mxu0 %v531
      %v556 = vpop.f32.mrf.mxu0
      %v557 = vadd.f32 0.0, %v556
      %558 = vmatmul.f32.gmra.mxu0 %v534
      %v559 = vpop.f32.mrf.mxu0
      %v560 = vadd.f32 0.0, %v559
      %561 = vdwg.mxu0
      %v562 = vadd.f32 %v525, %v557
      %v563 = vadd.f32 %v526, %v560
      %564 = vst [vmem:[%s271] sm:$0xff] %v562
      %565 = vst [vmem:[%s271 + $0x8] sm:$0x1] %v563
      %p566 = scmp.lt.s32.totalorder %s17, 1
      %s567 = scalar_select %p566, %s17, 1
      %s568 = smul.addr %s567, 2
      %s569 = smul.addr %s568, 8
      %s570 = scalar_lea.vmem %s6, %s569
      // Predicated region
      $region45: #{graph_conv.1} parent=43 // pred_check
        %p571 = pneg %p171
      $region46: #{graph_conv.1} parent=43 // pred_check_branch
        %573 = sbr.rel (%p571) target = $region48
      $region47: #{graph_conv.1} parent=43 // pred_region
        _
      $region48: #{graph_conv.1} parent=43 // pred_fallthru
        _
    $region44: #{graph_conv.1} parent=5 // pred_fallthru
      _
    %p574 = scmp.le.s32.totalorder 2, %s12
    // Predicated region
    $region49: #{graph_conv.1} parent=5 // pred_check
      %p575 = pneg %p574
    $region50: #{graph_conv.1} parent=5 // pred_check_branch
      %577 = sbr.rel (%p575) target = $region52
    $region51: #{graph_conv.1} parent=5 // pred_region
      %s578 = ssub.s32 %s12, 2
      // Predicated region
      $region53: #{graph_conv.1} parent=51 // pred_check
        %p579 = pneg %p177
      $region54: #{graph_conv.1} parent=51 // pred_check_branch
        %581 = sbr.rel (%p579) target = $region56
      $region55: #{graph_conv.1} parent=51 // pred_region
        %p582 = scmp.lt.s32.totalorder %s18, 1
        %s583 = scalar_select %p582, %s18, 1
        %s584 = smul.addr %s583, 2
        %s585 = smul.addr %s584, 8
        %s586 = scalar_lea.vmem %s6, %s585
      $region56: #{graph_conv.1} parent=51 // pred_fallthru
        _
    $region52: #{graph_conv.1} parent=5 // pred_fallthru
      _
  $region6: #{graph_conv.1} parent=0 // loop_footer
    %s16 = sadd.s32 1, %s12
  $region7: #{graph_conv.1} parent=0 // loop_footer_branch
    %11 = sbr.rel target = $region3
  $region8: #{graph_conv.1} parent=0 // loop_exit
    _

</llo_original>
